<compile_context>
chip_gen: v5e
topology: v5e:2x2
jax: 0.10.0
libtpu: 0.0.40
codegen_flags: <defaults>
</compile_context>

<pallas_src>
import jax
import jax.numpy as jnp
from jax.experimental import pallas as pl
from jax.experimental.pallas import tpu as pltpu

_LANE = 128
_SUBLANE = 8
_SMALL_BYTES = 2 * 1024 * 1024          # grid-less single-shot threshold
_MID_VMEM_BUDGET = 12 * 1024 * 1024     # double-buffered budget for 2-D path
_VMEM_LIMIT = 32 * 1024 * 1024          # safe scoped-VMEM limit on v5e/v6e/v7x


def _round_up(n, m):
    return (n + m - 1) // m * m


def _cdiv(a, b):
    return (a + b - 1) // b


# ---------------------------------------------------------------------------
# Kernels
# ---------------------------------------------------------------------------
def _linear_tanh_kernel(x_ref, w_ref, b_ref, o_ref):
    """One output tile with the full K dimension resident (small & mid paths)."""
    y = jnp.dot(x_ref[...].astype(w_ref.dtype), w_ref[...],
                preferred_element_type=jnp.float32)
    o_ref[...] = jnp.tanh(y + b_ref[...]).astype(o_ref.dtype)


def _linear_tanh_acc_kernel(x_ref, w_ref, b_ref, o_ref):
    """(M, N, K)-tiled kernel.

    The f32 output block doubles as the accumulator (it stays resident across
    the innermost K axis), so there is no VMEM scratch and no acc->out copy.
    Bias add + tanh run once per output tile in the k == last finalize.
    """
    k = pl.program_id(2)

    @pl.when(k == 0)
    def _init():
        o_ref[...] = jnp.zeros_like(o_ref)

    o_ref[...] += jnp.dot(x_ref[...].astype(w_ref.dtype), w_ref[...],
                          preferred_element_type=jnp.float32)

    @pl.when(k == pl.num_programs(2) - 1)
    def _finalize():
        o_ref[...] = jnp.tanh(o_ref[...] + b_ref[...])


# ---------------------------------------------------------------------------
# Parameter preparation (one-time, analogue of nn.Linear.__init__)
# ---------------------------------------------------------------------------
def prepare_params(weight, bias, compute_dtype=jnp.bfloat16):
    """Preprocess PyTorch-layout params exactly once.

    weight: (D_out, D_in), bias: (D_out,).
    Returns (w_prepped (D_in, N_pad) in compute_dtype, b_prepped (1, N_pad)
    float32, d_out).  Transpose, lane padding and the bf16 cast never happen
    per forward call.
    """
    weight = jnp.asarray(weight)
    bias = jnp.asarray(bias)
    d_out, _ = weight.shape
    n_align = _LANE if d_out <= _LANE else 2 * _LANE   # 256-aligned -> tn >= 256
    n_pad = _round_up(d_out, n_align)
    if n_pad != d_out:
        weight = jnp.pad(weight, ((0, n_pad - d_out), (0, 0)))
        bias = jnp.pad(bias, (0, n_pad - d_out))
    w_prepped = jnp.asarray(weight.T, dtype=compute_dtype)     # (D_in, N_pad)
    b_prepped = jnp.asarray(bias, dtype=jnp.float32).reshape(1, n_pad)
    return w_prepped, b_prepped, d_out


# ---------------------------------------------------------------------------
# pallas_call wrappers
# ---------------------------------------------------------------------------
def _call_small(x, w, b):
    m = x.shape[0]
    n = w.shape[1]
    return pl.pallas_call(
        _linear_tanh_kernel,
        out_shape=jax.ShapeDtypeStruct((m, n), jnp.float32),
        in_specs=[
            pl.BlockSpec(memory_space=pltpu.MemorySpace.VMEM),
            pl.BlockSpec(memory_space=pltpu.MemorySpace.VMEM),
            pl.BlockSpec(memory_space=pltpu.MemorySpace.VMEM),
        ],
        out_specs=pl.BlockSpec(memory_space=pltpu.MemorySpace.VMEM),
        compiler_params=pltpu.CompilerParams(vmem_limit_bytes=_VMEM_LIMIT),
    )(x, w, b)


def _call_2d(x, w, b, *, tm, tn):
    """2-D (N, M) grid, full-K blocks.  Weight tile index is independent of the
    inner M axis, so Pallas keeps it resident while x row-tiles stream."""
    m, k = x.shape
    n = w.shape[1]
    grid = (n // tn, _cdiv(m, tm))      # j outer, i inner
    return pl.pallas_call(
        _linear_tanh_kernel,
        out_shape=jax.ShapeDtypeStruct((m, n), jnp.float32),
        grid_spec=pltpu.PrefetchScalarGridSpec(
            num_scalar_prefetch=0,
            grid=grid,
            in_specs=[
                pl.BlockSpec((tm, k), lambda j, i: (i, 0)),
                pl.BlockSpec((k, tn), lambda j, i: (0, j)),
                pl.BlockSpec((1, tn), lambda j, i: (0, j)),
            ],
            out_specs=pl.BlockSpec((tm, tn), lambda j, i: (i, j)),
        ),
        compiler_params=pltpu.CompilerParams(
            dimension_semantics=("parallel", "parallel"),
            vmem_limit_bytes=_VMEM_LIMIT,
        ),
    )(x, w, b)


def _call_3d(x, w, b, *, tm, tn, tk):
    """3-D (M, N, K) grid with K innermost; output block is the accumulator."""
    m, k = x.shape
    n = w.shape[1]
    grid = (_cdiv(m, tm), n // tn, k // tk)
    return pl.pallas_call(
        _linear_tanh_acc_kernel,
        out_shape=jax.ShapeDtypeStruct((m, n), jnp.float32),
        grid_spec=pltpu.PrefetchScalarGridSpec(
            num_scalar_prefetch=0,
            grid=grid,
            in_specs=[
                pl.BlockSpec((tm, tk), lambda i, j, kk: (i, kk)),
                pl.BlockSpec((tk, tn), lambda i, j, kk: (kk, j)),
                pl.BlockSpec((1, tn), lambda i, j, kk: (0, j)),
            ],
            out_specs=pl.BlockSpec((tm, tn), lambda i, j, kk: (i, j)),
        ),
        compiler_params=pltpu.CompilerParams(
            dimension_semantics=("parallel", "parallel", "arbitrary"),
            vmem_limit_bytes=_VMEM_LIMIT,
        ),
    )(x, w, b)


# ---------------------------------------------------------------------------
# Forward pass
# ---------------------------------------------------------------------------
def linear_tanh(x, w_prepped, b_prepped, d_out, *, tm=512, tn=512, tk=1024):
    """Forward: tanh(x @ W + b) with W pre-transposed / padded / bf16-cast.

    x: (B, D_in).  Returns (B, d_out) float32.
    """
    x = jnp.asarray(x)
    m, k = x.shape
    k_w, n = w_prepped.shape
    assert k == k_w, (x.shape, w_prepped.shape)

    total_bytes = (m * k * x.dtype.itemsize
                   + k * n * w_prepped.dtype.itemsize
                   + m * n * 4)

    if total_bytes <= _SMALL_BYTES:
        out = _call_small(x, w_prepped, b_prepped)
    else:
        # Lane-dense tn dividing the (pre-padded) N; sublane-aligned tm.
        tn = next(t for t in (tn, 512, 256, 128) if t <= n and n % t == 0)
        tm = min(tm, _round_up(m, _SUBLANE))

        # Keep both v7x TensorCores busy: parallel (i, j) axes need >= 2 steps.
        if _cdiv(m, tm) * (n // tn) < 2:
            if n // tn == 1 and tn >= 2 * _LANE:
                tn //= 2
            elif m > _SUBLANE:
                tm = _round_up(_cdiv(m, 2), _SUBLANE)

        blk_bytes = (tm * k * x.dtype.itemsize
                     + k * tn * w_prepped.dtype.itemsize
                     + tm * tn * 4 + tn * 4)
        if 2 * blk_bytes <= _MID_VMEM_BUDGET:
            # Full-K blocks: no reduction axis, no accumulator traffic.
            out = _call_2d(x, w_prepped, b_prepped, tm=tm, tn=tn)
        else:
            if k % _LANE == 0:
                tk = next(t for t in (tk, 1024, 512, 256, 128) if k % t == 0)
                xk, wk = x, w_prepped
            else:
                # Rare ragged-K fallback: zero-pad both operands so the K tiles
                # never read undefined data into valid output rows.
                # TODO(synk): handle ragged K with a masked final K tile instead.
                k_pad = _round_up(k, 512)
                xk = jnp.pad(x, ((0, 0), (0, k_pad - k)))
                wk = jnp.pad(w_prepped, ((0, k_pad - k), (0, 0)))
                tk = 512
            out = _call_3d(xk, wk, b_prepped, tm=tm, tn=tn, tk=tk)

    if out.shape != (m, d_out):
        out = out[:m, :d_out]
    return out


# ---------------------------------------------------------------------------
# Self-test
# ---------------------------------------------------------------------------
if __name__ == "__main__":
    # --- Test 1: small shapes implied by the module (single-shot path). -----
    batch, input_dim, output_dim = 8, 32, 16
    key = jax.random.PRNGKey(0)
    kx, kw, kb = jax.random.split(key, 3)

    # nn.Linear default init: U(-1/sqrt(in_features), 1/sqrt(in_features))
    bound = 1.0 / jnp.sqrt(jnp.float32(input_dim))
    weight = jax.random.uniform(kw, (output_dim, input_dim),
                                minval=-bound, maxval=bound, dtype=jnp.float32)
    bias = jax.random.uniform(kb, (output_dim,),
                              minval=-bound, maxval=bound, dtype=jnp.float32)
    x = jax.random.normal(kx, (batch, input_dim), dtype=jnp.float32)

    params = prepare_params(weight, bias)     # one-time transpose/pad/bf16 cast
    out = linear_tanh(x, *params)
    jax.block_until_ready(out)

    ref = jnp.tanh(x @ weight.T + bias)
    assert out.shape == (batch, output_dim), out.shape
    # bf16 operands / f32 accumulate => loosened tolerance vs f32 reference.
    assert jnp.allclose(out, ref, atol=2e-2, rtol=0.0), float(
        jnp.max(jnp.abs(out - ref)))

    # --- Test 2: exercise the 2-D full-K pipelined path. ---------------------
    B2, K2, N2 = 256, 1024, 512
    k2x, k2w, k2b = jax.random.split(jax.random.PRNGKey(1), 3)
    w2 = jax.random.uniform(k2w, (N2, K2), minval=-0.05, maxval=0.05,
                            dtype=jnp.float32)
    b2 = jax.random.uniform(k2b, (N2,), minval=-0.05, maxval=0.05,
                            dtype=jnp.float32)
    x2 = jax.random.normal(k2x, (B2, K2), dtype=jnp.float32)

    out2 = linear_tanh(x2, *prepare_params(w2, b2))
    jax.block_until_ready(out2)
    ref2 = jnp.tanh(x2 @ w2.T + b2)
    assert out2.shape == (B2, N2), out2.shape
    assert jnp.allclose(out2, ref2, atol=3e-2, rtol=0.0), float(
        jnp.max(jnp.abs(out2 - ref2)))

    # --- Test 3: exercise the 3-D accumulator kernel directly (small tiles). -
    B3, K3, N3 = 128, 512, 128
    k3x, k3w, k3b = jax.random.split(jax.random.PRNGKey(2), 3)
    w3 = jax.random.uniform(k3w, (N3, K3), minval=-0.05, maxval=0.05,
                            dtype=jnp.float32)
    b3 = jax.random.uniform(k3b, (N3,), minval=-0.05, maxval=0.05,
                            dtype=jnp.float32)
    x3 = jax.random.normal(k3x, (B3, K3), dtype=jnp.float32)

    w3p, b3p, d3 = prepare_params(w3, b3)
    out3 = _call_3d(x3, w3p, b3p, tm=64, tn=128, tk=256)[:, :d3]
    jax.block_until_ready(out3)
    ref3 = jnp.tanh(x3 @ w3.T + b3)
    assert out3.shape == (B3, N3), out3.shape
    assert jnp.allclose(out3, ref3, atol=3e-2, rtol=0.0), float(
        jnp.max(jnp.abs(out3 - ref3)))

    print("KERNEL_OK")
</pallas_src>

<mosaic_0001>
module attributes {stable_mosaic.version = 11 : i64} {
  func.func @_linear_tanh_kernel(%arg0: memref<8x32xf32, #tpu.memory_space<vmem>>, %arg1: memref<32x128xbf16, #tpu.memory_space<vmem>>, %arg2: memref<1x128xf32, #tpu.memory_space<vmem>>, %arg3: memref<8x128xf32, #tpu.memory_space<vmem>>) attributes {dimension_semantics = [], scalar_prefetch = 0 : i64, scratch_operands = 0 : i64, tpu.core_type = #tpu.core_type<tc>} {
    %c0 = arith.constant 0 : index
    %c0_0 = arith.constant 0 : index
    %0 = vector.load %arg0[%c0, %c0_0] : memref<8x32xf32, #tpu.memory_space<vmem>>, vector<8x32xf32>
    %1 = arith.truncf %0 : vector<8x32xf32> to vector<8x32xbf16>
    %c0_1 = arith.constant 0 : index
    %c0_2 = arith.constant 0 : index
    %2 = vector.load %arg1[%c0_1, %c0_2] : memref<32x128xbf16, #tpu.memory_space<vmem>>, vector<32x128xbf16>
    %cst = arith.constant dense<0.000000e+00> : vector<8x128xf32>
    %3 = tpu.matmul %1, %2, %cst {dimension_numbers = #tpu.dot_dimension_numbers<[1], [0], [0], [1], [0, 0, 1, 1], [], []>} : vector<8x32xbf16>, vector<32x128xbf16>, vector<8x128xf32> -> vector<8x128xf32>
    %c0_3 = arith.constant 0 : index
    %c0_4 = arith.constant 0 : index
    %4 = vector.load %arg2[%c0_3, %c0_4] : memref<1x128xf32, #tpu.memory_space<vmem>>, vector<1x128xf32>
    %5 = vector.broadcast %4 : vector<1x128xf32> to vector<8x128xf32>
    %6 = arith.addf %3, %5 : vector<8x128xf32>
    %7 = math.tanh %6 : vector<8x128xf32>
    %c0_5 = arith.constant 0 : index
    %c0_6 = arith.constant 0 : index
    %8 = vector.load %arg3[%c0_5, %c0_6] : memref<8x128xf32, #tpu.memory_space<vmem>>, vector<8x128xf32>
    tpu.vector_store %arg3[%c0_5, %c0_6], %7 {strides = array<i32>} : memref<8x128xf32, #tpu.memory_space<vmem>>, vector<8x128xf32>,
    return
  }
}

</mosaic_0001>

<llo_original>
// kernel: tpu_custom_call.1
$region0: #{tpu_custom_call.1}
  #allocation0 [shape = 'u32[]', space=smem, size = 0x4, offset = 0x4, fixed_abs, tag = 'smem constant byte address 0x4 - core index']
  #allocation1 [shape = 'u32[72,128]{1,0:T(1,128)}', space=vmem, size = 0x9000, scoped, tag = 'internal scratch']
  %s0 = inlined_call_operand.hbm [shape: f32[8,32], index: 0, kind: input, shape index: {}]
  %s1 = inlined_call_operand.hbm [shape: bf16[32,128], index: 1, kind: input, shape index: {}]
  %s2 = inlined_call_operand.vmem [shape: f32[1,128], index: 2, kind: input, shape index: {}]
  %s3 = inlined_call_operand.hbm [shape: f32[8,128], index: 3, kind: output, shape index: {}]
  %s4 = sld [smem:[#allocation0]]
  $region30: #{tpu_custom_call.1} parent=0
    _
  %s6 = ssub.s32 1, %s4
  %s7 = scalar_select 0, %s6, %s4
  $region1: #{tpu_custom_call.1} parent=0
    #allocation2 [shape = 'u8[4096]{0}', space=vmem, size = 0x1000, scoped, tag = 'input window, operand 0, single buffered']
    #allocation3 [shape = 's32[1]{0}', space=sflag, size = 0x4, scoped, tag = 'scoped memory for tpu_custom_call.1']
    #allocation4 [shape = 's32[1]{0}', space=sflag, size = 0x4, scoped, tag = 'scoped memory for tpu_custom_call.1']
    #allocation5 [shape = 'u8[8192]{0}', space=vmem, size = 0x2000, scoped, tag = 'input window, operand 1, single buffered']
    #allocation6 [shape = 's32[1]{0}', space=sflag, size = 0x4, scoped, tag = 'scoped memory for tpu_custom_call.1']
    #allocation7 [shape = 'u8[4096]{0}', space=vmem, size = 0x1000, scoped, tag = 'output window, operand 0, single buffered']
    %8 = vsyncpa [#allocation3], 0
    %9 = vsyncpa [#allocation6], 0
    %10 = vsyncpa [#allocation4], 0
    // Predicated region
    $region2: #{tpu_custom_call.1} parent=1 // pred_check
      _
    $region3: #{tpu_custom_call.1} parent=1 // pred_check_branch
      %12 = sbr.rel (0) target = $region5
    $region4: #{tpu_custom_call.1} parent=1 // pred_region
      %14 = vsyncadd [#allocation3], 0
      %s16 = sshll.u32 %s0, 4
      %s17 = int_to_ptr.hbm [resolvable:$true] %s16
      %s18 = sshll.u32 [#allocation2], 4
      %s19 = int_to_ptr.vmem [resolvable:$true] %s18
      %21 = dma.hbm_to_vmem [thread:$0]  %s17, 128, %s19, [#allocation3]
    $region5: #{tpu_custom_call.1} parent=1 // pred_fallthru
      _
    // Predicated region
    $region6: #{tpu_custom_call.1} parent=1 // pred_check
      _
    $region7: #{tpu_custom_call.1} parent=1 // pred_check_branch
      %23 = sbr.rel (0) target = $region9
    $region8: #{tpu_custom_call.1} parent=1 // pred_region
      %25 = vsyncadd [#allocation6], 0
      %s26 = sshll.u32 %s1, 4
      %s27 = int_to_ptr.hbm [resolvable:$true] %s26
      %s28 = sshll.u32 [#allocation5], 4
      %s29 = int_to_ptr.vmem [resolvable:$true] %s28
      %34 = dma.hbm_to_vmem [thread:$0]  %s27, 256, %s29, [#allocation6], 64, 64, 4
    $region9: #{tpu_custom_call.1} parent=1 // pred_fallthru
      _
    // Predicated region
    $region10: #{tpu_custom_call.1} parent=1 // pred_check
      _
    $region11: #{tpu_custom_call.1} parent=1 // pred_check_branch
      %36 = sbr.rel (0) target = $region13
    $region12: #{tpu_custom_call.1} parent=1 // pred_region
      _
    $region13: #{tpu_custom_call.1} parent=1 // pred_fallthru
      _
    // Predicated region
    $region14: #{tpu_custom_call.1} parent=1 // pred_check
      _
    $region15: #{tpu_custom_call.1} parent=1 // pred_check_branch
      %38 = sbr.rel (0) target = $region17
    $region16: #{tpu_custom_call.1} parent=1 // pred_region
      %40 = dma.done [#allocation3], 128
    $region17: #{tpu_custom_call.1} parent=1 // pred_fallthru
      _
    // Predicated region
    $region18: #{tpu_custom_call.1} parent=1 // pred_check
      _
    $region19: #{tpu_custom_call.1} parent=1 // pred_check_branch
      %42 = sbr.rel (0) target = $region21
    $region20: #{tpu_custom_call.1} parent=1 // pred_region
      %44 = dma.done [#allocation6], 256
    $region21: #{tpu_custom_call.1} parent=1 // pred_fallthru
      _
    %v46 = vld [vmem:[#allocation2] sm:$0xff]
    %v47 = vpack.c.bf16 %v46, %v46
    %v48 = vld [vmem:[#allocation5] sm:$0xf]
    %v49 = vld [vmem:[#allocation5 + $0x4] sm:$0xf]
    %v50 = vld [vmem:[#allocation5 + $0x8] sm:$0xf]
    %v51 = vld [vmem:[#allocation5 + $0xc] sm:$0xf]
    %v52 = vld [vmem:[%s2] sm:$0x1]
    %v54 = vperm.slane %v52, 0
    %v60 = vunpack.c.l.b16 %v48
    %v61 = vunpack.c.l.b16 %v49
    %v62 = vunpack.c.l.b16 %v50
    %v63 = vunpack.c.l.b16 %v51
    %v64 = vpack.c.b16 %v61, %v60
    %v65 = vpack.c.b16 %v63, %v62
    %vm68 = vcmask 261120
    %v70 = vsel %vm68, %v47, 0
    %72 = vmatpush.bf16.msra.mxu0 0
    %73 = vmatpush.bf16.msra.mxu0 0
    %74 = vmatpush.bf16.msra.mxu0 0
    %75 = vmatpush.bf16.msra.mxu0 0
    %76 = vmatpush.bf16.msra.mxu0 0
    %77 = vmatpush.bf16.msra.mxu0 0
    %78 = vmatpush.bf16.msra.mxu0 %v65
    %79 = vmatpush.bf16.msra.mxu0 %v64
    %80 = vmatmul.bf16.gmra.mxu0 %v70
    %v81 = vpop.f32.mrf.mxu0
    %v82 = vadd.f32 %v54, %v81
    %v83 = vpop.f32.mrf.mxu0
    %84 = vdwg.mxu0
    %v85 = vtanh.pop %v82
    %86 = vst [vmem:[#allocation7] sm:$0xff] %v85
    // Predicated region
    $region22: #{tpu_custom_call.1} parent=1 // pred_check
      _
    $region23: #{tpu_custom_call.1} parent=1 // pred_check_branch
      %88 = sbr.rel (0) target = $region25
    $region24: #{tpu_custom_call.1} parent=1 // pred_region
      %90 = vsyncadd [#allocation4], 0
      %s92 = sshll.u32 [#allocation7], 4
      %s93 = int_to_ptr.vmem [resolvable:$true] %s92
      %s94 = sshll.u32 %s3, 4
      %s95 = int_to_ptr.hbm [resolvable:$true] %s94
      %97 = dma.vmem_to_hbm [thread:$0]  %s93, 128, %s95, [#allocation4]
    $region25: #{tpu_custom_call.1} parent=1 // pred_fallthru
      _
    // Predicated region
    $region26: #{tpu_custom_call.1} parent=1 // pred_check
      _
    $region27: #{tpu_custom_call.1} parent=1 // pred_check_branch
      %99 = sbr.rel (0) target = $region29
    $region28: #{tpu_custom_call.1} parent=1 // pred_region
      %101 = dma.done [#allocation4], 128
    $region29: #{tpu_custom_call.1} parent=1 // pred_fallthru
      _
    %102 = vsyncpa [#allocation3], 1
    %103 = vsyncpa [#allocation6], 1
    %104 = vsyncpa [#allocation4], 1

</llo_original>
